<compile_context>
chip_gen: v7x
topology: tpu7x:2x2x1
jax: 0.10.0
libtpu: 0.0.40
codegen_flags: <defaults>
</compile_context>

<pallas_src>
import math
from functools import partial

import jax
import jax.numpy as jnp
from jax import lax
from jax.experimental import pallas as pl
from jax.experimental.pallas import tpu as pltpu


def _round_up(x, m):
    return ((x + m - 1) // m) * m


def _synthesis_kernel(w_ref, b_ref, p_ref, o_ref, *, activation):
    # w_ref: (Cout, Ck)   b_ref: (Cout, 1)   p_ref: (Ck, TM)   o_ref: (Cout, TM)
    acc = jnp.dot(w_ref[...], p_ref[...], preferred_element_type=jnp.float32)
    acc = acc + b_ref[...]                      # bias broadcast along lanes
    o_ref[...] = activation(acc).astype(o_ref.dtype)


def synthesis_layer(x_nchw, weight, bias, *, non_linearity=lambda v: v,
                    m_tile=1024, compute_dtype=jnp.float32):
    """JAX/Pallas equivalent of SynthesisLayer.forward.

    x_nchw : (N, Cin, H, W)    float32
    weight : (Cout, Cin, K, K) float32 (already scaled by 1/Cout**2, as in __init__)
    bias   : (Cout,)           float32 (zeros, as in __init__)
    returns: (N, Cout, Ho, Wo) float32  (Ho == H, Wo == W for odd K)
    """
    N, Cin, H, W = x_nchw.shape
    Cout, _, K, _ = weight.shape
    pad = (K - 1) // 2
    Ho = H + 2 * pad - K + 1
    Wo = W + 2 * pad - K + 1
    M = N * Ho * Wo
    KKC = K * K * Cin

    # Tile sizes / padded extents.
    TM = min(m_tile, _round_up(M, 128))         # lane-dim tile, multiple of 128
    Mp = _round_up(M, TM)
    Ck = _round_up(KKC, 8)                      # contraction dim, sublane aligned

    # ---- glue: ReplicationPad2d + fused im2col, transposed layout ----
    xp = jnp.pad(x_nchw, ((0, 0), (0, 0), (pad, pad), (pad, pad)), mode="edge")
    shifts = []
    for dh in range(K):
        for dw in range(K):
            s = xp[:, :, dh:dh + Ho, dw:dw + Wo]              # (N, Cin, Ho, Wo)
            shifts.append(jnp.transpose(s, (1, 0, 2, 3)).reshape(Cin, M))
    patches = jnp.concatenate(shifts, axis=0)                 # (K*K*Cin, M)
    patches = jnp.pad(patches, ((0, Ck - KKC), (0, Mp - M)))
    patches = patches.astype(compute_dtype)                   # (Ck, Mp)

    # Weight -> (Cout, K*K*Cin), same (dh, dw, c) ordering as the patch rows.
    w2 = jnp.transpose(weight, (0, 2, 3, 1)).reshape(Cout, KKC)
    w2 = jnp.pad(w2, ((0, 0), (0, Ck - KKC))).astype(compute_dtype)
    b2 = bias.reshape(Cout, 1).astype(jnp.float32)

    out2d = pl.pallas_call(
        partial(_synthesis_kernel, activation=non_linearity),
        out_shape=jax.ShapeDtypeStruct((Cout, Mp), x_nchw.dtype),
        grid_spec=pltpu.PrefetchScalarGridSpec(
            num_scalar_prefetch=0,
            grid=(Mp // TM,),
            in_specs=[
                pl.BlockSpec((Cout, Ck), lambda i: (0, 0)),   # weights (resident)
                pl.BlockSpec((Cout, 1), lambda i: (0, 0)),    # bias
                pl.BlockSpec((Ck, TM), lambda i: (0, i)),     # patch tile
            ],
            out_specs=pl.BlockSpec((Cout, TM), lambda i: (0, i)),
        ),
        compiler_params=pltpu.CompilerParams(
            dimension_semantics=("parallel",),                # megacore-sharded on v7x
            vmem_limit_bytes=48 * 1024 * 1024),
    )(w2, b2, patches)

    out = out2d[:, :M].reshape(Cout, N, Ho, Wo)
    return jnp.transpose(out, (1, 0, 2, 3))                   # back to NCHW


def init_synthesis_params(key, input_ft, output_ft, kernel_size):
    """Deterministic init mirroring the module: PyTorch-like uniform init,
    weight divided by output_ft**2, bias zeroed."""
    fan_in = input_ft * kernel_size * kernel_size
    bound = 1.0 / math.sqrt(fan_in)
    w = jax.random.uniform(key, (output_ft, input_ft, kernel_size, kernel_size),
                           jnp.float32, minval=-bound, maxval=bound)
    w = w / float(output_ft) ** 2
    b = jnp.zeros((output_ft,), jnp.float32)
    return w, b


def _reference(x_nchw, weight, bias, kernel_size):
    pad = (kernel_size - 1) // 2
    xp = jnp.pad(x_nchw, ((0, 0), (0, 0), (pad, pad), (pad, pad)), mode="edge")
    y = lax.conv_general_dilated(xp, weight, window_strides=(1, 1),
                                 padding="VALID",
                                 dimension_numbers=("NCHW", "OIHW", "NCHW"))
    return y + bias[None, :, None, None]


if __name__ == "__main__":
    # SynthesisLayer(input_ft=4, output_ft=4, kernel_size=3, non_linearity=Identity)
    N, Cin, H, W = 2, 4, 16, 16
    Cout, K = 4, 3

    key = jax.random.PRNGKey(0)
    kx, kw = jax.random.split(key)
    x = jax.random.normal(kx, (N, Cin, H, W), jnp.float32)
    weight, bias = init_synthesis_params(kw, Cin, Cout, K)

    ref = _reference(x, weight, bias, K)

    # float32 path (matches the PyTorch module bit-for-bit semantics).
    out = synthesis_layer(x, weight, bias)          # non_linearity = Identity
    out = jax.block_until_ready(out)
    assert out.shape == (N, Cout, H, W)
    assert jnp.allclose(out, ref, atol=1e-5, rtol=1e-5), "f32 mismatch vs reference conv"

    # bf16-compute path (v6e/v7x MXU fast path, f32 accumulation) — loose check.
    out_bf16 = synthesis_layer(x, weight, bias, compute_dtype=jnp.bfloat16)
    out_bf16 = jax.block_until_ready(out_bf16)
    assert jnp.allclose(out_bf16, ref, atol=1e-2, rtol=1e-1), "bf16 mismatch vs reference conv"

    print("KERNEL_OK")
</pallas_src>

<mosaic_0001>
module attributes {stable_mosaic.version = 11 : i64} {
  func.func @_synthesis_kernel(%arg0: i32, %arg1: memref<4x40xf32, #tpu.memory_space<vmem>>, %arg2: memref<4x1xf32, #tpu.memory_space<vmem>>, %arg3: memref<40x512xf32, #tpu.memory_space<vmem>>, %arg4: memref<4x512xf32, #tpu.memory_space<vmem>>) attributes {dimension_semantics = [#tpu.dimension_semantics<parallel>], iteration_bounds = array<i64: 1>, scalar_prefetch = 0 : i64, scratch_operands = 0 : i64, tpu.core_type = #tpu.core_type<tc>, window_params = [{pipeline_mode = #tpu.pipeline_mode<synchronous>, transform_indices = @transform_0, window_bounds = array<i64: 4, 40>}, {pipeline_mode = #tpu.pipeline_mode<synchronous>, transform_indices = @transform_1, window_bounds = array<i64: 4, 1>}, {transform_indices = @transform_2, window_bounds = array<i64: 40, 512>}, {transform_indices = @transform_3, window_bounds = array<i64: 4, 512>}]} {
    %c0 = arith.constant 0 : index
    %c0_0 = arith.constant 0 : index
    %0 = vector.load %arg1[%c0, %c0_0] : memref<4x40xf32, #tpu.memory_space<vmem>>, vector<4x40xf32>
    %c0_1 = arith.constant 0 : index
    %c0_2 = arith.constant 0 : index
    %1 = vector.load %arg3[%c0_1, %c0_2] : memref<40x512xf32, #tpu.memory_space<vmem>>, vector<40x512xf32>
    %cst = arith.constant dense<0.000000e+00> : vector<4x512xf32>
    %2 = tpu.matmul %0, %1, %cst {dimension_numbers = #tpu.dot_dimension_numbers<[1], [0], [0], [1], [0, 0, 1, 1], [], []>} : vector<4x40xf32>, vector<40x512xf32>, vector<4x512xf32> -> vector<4x512xf32>
    %c0_3 = arith.constant 0 : index
    %c0_4 = arith.constant 0 : index
    %3 = vector.load %arg2[%c0_3, %c0_4] : memref<4x1xf32, #tpu.memory_space<vmem>>, vector<4x1xf32>
    %4 = vector.broadcast %3 : vector<4x1xf32> to vector<4x512xf32>
    %5 = arith.addf %2, %4 : vector<4x512xf32>
    %c0_5 = arith.constant 0 : index
    %c0_6 = arith.constant 0 : index
    %6 = vector.load %arg4[%c0_5, %c0_6] : memref<4x512xf32, #tpu.memory_space<vmem>>, vector<4x512xf32>
    tpu.vector_store %arg4[%c0_5, %c0_6], %5 {strides = array<i32>} : memref<4x512xf32, #tpu.memory_space<vmem>>, vector<4x512xf32>,
    return
  }
  func.func @transform_0(%arg0: i32) -> (i32, i32) {
    %c0_i32 = arith.constant 0 : i32
    %c0_i32_0 = arith.constant 0 : i32
    %c0_i32_1 = arith.constant 0 : i32
    return %c0_i32, %c0_i32_0 : i32, i32
  }
  func.func @transform_1(%arg0: i32) -> (i32, i32) {
    %c0_i32 = arith.constant 0 : i32
    %c0_i32_0 = arith.constant 0 : i32
    %c0_i32_1 = arith.constant 0 : i32
    return %c0_i32, %c0_i32_0 : i32, i32
  }
  func.func @transform_2(%arg0: i32) -> (i32, i32) {
    %c0_i32 = arith.constant 0 : i32
    %c0_i32_0 = arith.constant 0 : i32
    return %c0_i32, %arg0 : i32, i32
  }
  func.func @transform_3(%arg0: i32) -> (i32, i32) {
    %c0_i32 = arith.constant 0 : i32
    %c0_i32_0 = arith.constant 0 : i32
    return %c0_i32, %arg0 : i32, i32
  }
}

</mosaic_0001>

<llo_original>
// kernel: tpu_custom_call.1
$region0: #{tpu_custom_call.1}
  #allocation0 [shape = 'u32[]', space=smem, size = 0x4, offset = 0x4, fixed_abs, tag = 'smem constant byte address 0x4 - core index']
  #allocation1 [shape = 'u32[144,128]{1,0:T(1,128)}', space=vmem, size = 0x12000, scoped, tag = 'internal scratch']
  %s0 = inlined_call_operand.vmem [shape: f32[4,40], index: 0, kind: input, shape index: {}]
  %s1 = inlined_call_operand.vmem [shape: f32[4,1], index: 1, kind: input, shape index: {}]
  %s2 = inlined_call_operand.hbm [shape: f32[40,512], index: 2, kind: input, shape index: {}]
  %s3 = inlined_call_operand.hbm [shape: f32[4,512], index: 3, kind: output, shape index: {}]
  %s4 = sld [smem:[#allocation0]]
  $region26: #{tpu_custom_call.1} parent=0
    _
  %s6 = ssub.s32 1, %s4
  %s7 = scalar_select 0, %s6, %s4
  $region1: #{tpu_custom_call.1} parent=0
    #allocation2 [shape = 'u8[81920]{0}', space=vmem, size = 0x14000, scoped, tag = 'input window, operand 2, single buffered']
    #allocation3 [shape = 's32[1]{0}', space=sflag, size = 0x4, scoped, tag = 'scoped memory for tpu_custom_call.1']
    #allocation4 [shape = 's32[1]{0}', space=sflag, size = 0x4, scoped, tag = 'scoped memory for tpu_custom_call.1']
    #allocation5 [shape = 'u8[8192]{0}', space=vmem, size = 0x2000, scoped, tag = 'output window, operand 0, single buffered']
    %8 = vsyncpa [#allocation3], 0
    %9 = vsyncpa [#allocation4], 0
    // Predicated region
    $region2: #{tpu_custom_call.1} parent=1 // pred_check
      _
    $region3: #{tpu_custom_call.1} parent=1 // pred_check_branch
      %11 = sbr.rel (0) target = $region5
    $region4: #{tpu_custom_call.1} parent=1 // pred_region
      _
    $region5: #{tpu_custom_call.1} parent=1 // pred_fallthru
      _
    // Predicated region
    $region6: #{tpu_custom_call.1} parent=1 // pred_check
      _
    $region7: #{tpu_custom_call.1} parent=1 // pred_check_branch
      %13 = sbr.rel (0) target = $region9
    $region8: #{tpu_custom_call.1} parent=1 // pred_region
      _
    $region9: #{tpu_custom_call.1} parent=1 // pred_fallthru
      _
    // Predicated region
    $region10: #{tpu_custom_call.1} parent=1 // pred_check
      _
    $region11: #{tpu_custom_call.1} parent=1 // pred_check_branch
      %15 = sbr.rel (0) target = $region13
    $region12: #{tpu_custom_call.1} parent=1 // pred_region
      %s17 = ssub.s32 2560, 2560
      %18 = vsyncadd [#allocation3], %s17
      %s19 = sshll.u32 [#allocation2], 4
      %s20 = int_to_ptr.vmem [resolvable:$true] %s19
      %25 = dma.hbm_to_vmem [thread:$0]  %s2, 2560, %s20, [#allocation3], 512, 512, 32
    $region13: #{tpu_custom_call.1} parent=1 // pred_fallthru
      _
    // Predicated region
    $region14: #{tpu_custom_call.1} parent=1 // pred_check
      _
    $region15: #{tpu_custom_call.1} parent=1 // pred_check_branch
      %27 = sbr.rel (0) target = $region17
    $region16: #{tpu_custom_call.1} parent=1 // pred_region
      %28 = dma.done [#allocation3], 2560
    $region17: #{tpu_custom_call.1} parent=1 // pred_fallthru
      _
    %v29 = vld [vmem:[%s0] sm:$0xf]
    %v30 = vld [vmem:[#allocation2] sm:$0xff]
    %v31 = vld [vmem:[#allocation2 + $0x8] sm:$0xff]
    %v32 = vld [vmem:[#allocation2 + $0x10] sm:$0xff]
    %v33 = vld [vmem:[#allocation2 + $0x18] sm:$0xff]
    %v34 = vld [vmem:[#allocation2 + $0x20] sm:$0xff]
    %v35 = vld [vmem:[#allocation2 + $0x28] sm:$0xff]
    %v36 = vld [vmem:[#allocation2 + $0x30] sm:$0xff]
    %v37 = vld [vmem:[#allocation2 + $0x38] sm:$0xff]
    %v38 = vld [vmem:[#allocation2 + $0x40] sm:$0xff]
    %v39 = vld [vmem:[#allocation2 + $0x48] sm:$0xff]
    %v40 = vld [vmem:[#allocation2 + $0x50] sm:$0xff]
    %v41 = vld [vmem:[#allocation2 + $0x58] sm:$0xff]
    %v42 = vld [vmem:[#allocation2 + $0x60] sm:$0xff]
    %v43 = vld [vmem:[#allocation2 + $0x68] sm:$0xff]
    %v44 = vld [vmem:[#allocation2 + $0x70] sm:$0xff]
    %v45 = vld [vmem:[#allocation2 + $0x78] sm:$0xff]
    %v46 = vld [vmem:[#allocation2 + $0x80] sm:$0xff]
    %v47 = vld [vmem:[#allocation2 + $0x88] sm:$0xff]
    %v48 = vld [vmem:[#allocation2 + $0x90] sm:$0xff]
    %v49 = vld [vmem:[#allocation2 + $0x98] sm:$0xff]
    %v50 = vld [vmem:[%s1] sm:$0xf]
    %52 = vset.pattern.permute.xlu0 0
    %53 = vperm.xlu0 %52, %v50
    %v54 = vpop.permute.xlu0 %53
    %vm56 = vcmask 326656
    %v58 = vsel %vm56, %v29, 0
    %60 = vmatprep.subr.mxu0 %v31
    %61 = vmatpush1.msra.mxu0 %v30
    %62 = vmatprep.subr.mxu0 %v35
    %63 = vmatpush1.msra.mxu0 %v34
    %64 = vmatprep.subr.mxu0 %v39
    %65 = vmatpush1.msra.mxu0 %v38
    %66 = vmatprep.subr.mxu0 %v43
    %67 = vmatpush1.msra.mxu0 %v42
    %68 = vmatprep.subr.mxu0 %v47
    %69 = vmatpush1.msra.mxu0 %v46
    %70 = vmatprep.subr.mxu0 0.0
    %71 = vmatpush1.msra.mxu0 0.0
    %72 = vmatprep.subr.mxu0 0.0
    %73 = vmatpush1.msra.mxu0 0.0
    %74 = vmatprep.subr.mxu0 0.0
    %75 = vmatpush1.msra.mxu0 0.0
    %76 = vmatprep.subr.mxu0 0.0
    %77 = vmatpush1.msra.mxu0 0.0
    %78 = vmatprep.subr.mxu0 0.0
    %79 = vmatpush1.msra.mxu0 0.0
    %80 = vmatprep.subr.mxu0 0.0
    %81 = vmatpush1.msra.mxu0 0.0
    %82 = vmatprep.subr.mxu0 0.0
    %83 = vmatpush1.msra.mxu0 0.0
    %84 = vmatprep.subr.mxu0 0.0
    %85 = vmatpush1.msra.mxu0 0.0
    %86 = vmatprep.subr.mxu0 0.0
    %87 = vmatpush1.msra.mxu0 0.0
    %88 = vmatprep.subr.mxu0 0.0
    %89 = vmatpush1.msra.mxu0 0.0
    %90 = vmatprep.subr.mxu0 0.0
    %91 = vmatpush1.msra.mxu0 0.0
    %92 = vmatprep.subr.mxu0 0.0
    %93 = vmatpush1.msra.mxu0 0.0
    %94 = vmatprep.subr.mxu0 0.0
    %95 = vmatpush1.msra.mxu0 0.0
    %96 = vmatprep.subr.mxu0 0.0
    %97 = vmatpush1.msra.mxu0 0.0
    %98 = vmatprep.subr.mxu0 0.0
    %99 = vmatpush1.msra.mxu0 0.0
    %100 = vmatprep.subr.mxu0 0.0
    %101 = vmatpush1.msra.mxu0 0.0
    %102 = vmatprep.subr.mxu0 0.0
    %103 = vmatpush1.msra.mxu0 0.0
    %104 = vmatprep.subr.mxu0 0.0
    %105 = vmatpush1.msra.mxu0 0.0
    %106 = vmatprep.subr.mxu0 0.0
    %107 = vmatpush1.msra.mxu0 0.0
    %108 = vmatprep.subr.mxu0 0.0
    %109 = vmatpush1.msra.mxu0 0.0
    %110 = vmatprep.subr.mxu0 0.0
    %111 = vmatpush1.msra.mxu0 0.0
    %112 = vmatprep.subr.mxu0 0.0
    %113 = vmatpush1.msra.mxu0 0.0
    %114 = vmatprep.subr.mxu0 0.0
    %115 = vmatpush1.msra.mxu0 0.0
    %116 = vmatprep.subr.mxu0 0.0
    %117 = vmatpush1.msra.mxu0 0.0
    %118 = vmatprep.subr.mxu0 0.0
    %119 = vmatpush1.msra.mxu0 0.0
    %120 = vmatprep.subr.mxu0 0.0
    %121 = vmatpush1.msra.mxu0 0.0
    %122 = vmatprep.subr.mxu0 0.0
    %123 = vmatpush1.msra.mxu0 0.0
    %124 = vmatprep.mubr.f32.mxu0 0.0
    %125 = vmatmul.mubr.f32.gmra.mrb[0].mxu0 %v58
    %v126 = vpop.f32.mrb[0].mxu0
    %v127 = vadd.f32 %v54, %v126
    %v128 = vpop.f32.mrb[0].mxu0
    %v129 = vadd.f32 %v54, %v128
    %130 = vdwg.mxu0
    %131 = vmatprep.subr.mxu0 %v33
    %132 = vmatpush1.msra.mxu0 %v32
    %133 = vmatprep.subr.mxu0 %v37
    %134 = vmatpush1.msra.mxu0 %v36
    %135 = vmatprep.subr.mxu0 %v41
    %136 = vmatpush1.msra.mxu0 %v40
    %137 = vmatprep.subr.mxu0 %v45
    %138 = vmatpush1.msra.mxu0 %v44
    %139 = vmatprep.subr.mxu0 %v49
    %140 = vmatpush1.msra.mxu0 %v48
    %141 = vmatprep.subr.mxu0 0.0
    %142 = vmatpush1.msra.mxu0 0.0
    %143 = vmatprep.subr.mxu0 0.0
    %144 = vmatpush1.msra.mxu0 0.0
    %145 = vmatprep.subr.mxu0 0.0
    %146 = vmatpush1.msra.mxu0 0.0
    %147 = vmatprep.subr.mxu0 0.0
    %148 = vmatpush1.msra.mxu0 0.0
    %149 = vmatprep.subr.mxu0 0.0
    %150 = vmatpush1.msra.mxu0 0.0
    %151 = vmatprep.subr.mxu0 0.0
    %152 = vmatpush1.msra.mxu0 0.0
    %153 = vmatprep.subr.mxu0 0.0
    %154 = vmatpush1.msra.mxu0 0.0
    %155 = vmatprep.subr.mxu0 0.0
    %156 = vmatpush1.msra.mxu0 0.0
    %157 = vmatprep.subr.mxu0 0.0
    %158 = vmatpush1.msra.mxu0 0.0
    %159 = vmatprep.subr.mxu0 0.0
    %160 = vmatpush1.msra.mxu0 0.0
    %161 = vmatprep.subr.mxu0 0.0
    %162 = vmatpush1.msra.mxu0 0.0
    %163 = vmatprep.subr.mxu0 0.0
    %164 = vmatpush1.msra.mxu0 0.0
    %165 = vmatprep.subr.mxu0 0.0
    %166 = vmatpush1.msra.mxu0 0.0
    %167 = vmatprep.subr.mxu0 0.0
    %168 = vmatpush1.msra.mxu0 0.0
    %169 = vmatprep.subr.mxu0 0.0
    %170 = vmatpush1.msra.mxu0 0.0
    %171 = vmatprep.subr.mxu0 0.0
    %172 = vmatpush1.msra.mxu0 0.0
    %173 = vmatprep.subr.mxu0 0.0
    %174 = vmatpush1.msra.mxu0 0.0
    %175 = vmatprep.subr.mxu0 0.0
    %176 = vmatpush1.msra.mxu0 0.0
    %177 = vmatprep.subr.mxu0 0.0
    %178 = vmatpush1.msra.mxu0 0.0
    %179 = vmatprep.subr.mxu0 0.0
    %180 = vmatpush1.msra.mxu0 0.0
    %181 = vmatprep.subr.mxu0 0.0
    %182 = vmatpush1.msra.mxu0 0.0
    %183 = vmatprep.subr.mxu0 0.0
    %184 = vmatpush1.msra.mxu0 0.0
    %185 = vmatprep.subr.mxu0 0.0
    %186 = vmatpush1.msra.mxu0 0.0
    %187 = vmatprep.subr.mxu0 0.0
    %188 = vmatpush1.msra.mxu0 0.0
    %189 = vmatprep.subr.mxu0 0.0
    %190 = vmatpush1.msra.mxu0 0.0
    %191 = vmatprep.subr.mxu0 0.0
    %192 = vmatpush1.msra.mxu0 0.0
    %193 = vmatprep.subr.mxu0 0.0
    %194 = vmatpush1.msra.mxu0 0.0
    %195 = vmatprep.mubr.f32.mxu0 0.0
    %196 = vmatmul.mubr.f32.gmra.mrb[0].mxu0 %v58
    %v197 = vpop.f32.mrb[0].mxu0
    %v198 = vadd.f32 %v54, %v197
    %v199 = vpop.f32.mrb[0].mxu0
    %v200 = vadd.f32 %v54, %v199
    %201 = vdwg.mxu0
    %v206 = vcombine.low %v127, %v129
    %v207 = vcombine.low %v198, %v200
    %210 = vst [vmem:[#allocation5] sm:$0xff] %v206
    %211 = vst [vmem:[#allocation5 + $0x8] sm:$0xff] %v207
    // Predicated region
    $region18: #{tpu_custom_call.1} parent=1 // pred_check
      _
    $region19: #{tpu_custom_call.1} parent=1 // pred_check_branch
      %213 = sbr.rel (0) target = $region21
    $region20: #{tpu_custom_call.1} parent=1 // pred_region
      %s215 = ssub.s32 256, 256
      %216 = vsyncadd [#allocation4], %s215
      %s218 = sshll.u32 [#allocation5], 4
      %s219 = int_to_ptr.vmem [resolvable:$true] %s218
      %221 = dma.vmem_to_hbm [thread:$0]  %s219, 256, %s3, [#allocation4]
    $region21: #{tpu_custom_call.1} parent=1 // pred_fallthru
      _
    // Predicated region
    $region22: #{tpu_custom_call.1} parent=1 // pred_check
      _
    $region23: #{tpu_custom_call.1} parent=1 // pred_check_branch
      %223 = sbr.rel (0) target = $region25
    $region24: #{tpu_custom_call.1} parent=1 // pred_region
      %224 = dma.done [#allocation4], 256
    $region25: #{tpu_custom_call.1} parent=1 // pred_fallthru
      _
    %225 = vsyncpa [#allocation3], 1
    %226 = vsyncpa [#allocation4], 1

</llo_original>
